<compile_context>
chip_gen: v7x
topology: tpu7x:2x2x1
jax: 0.10.0
libtpu: 0.0.40
codegen_flags: <defaults>
</compile_context>

<pallas_src>
import functools

import jax
import jax.numpy as jnp
import numpy as np
from jax.experimental import pallas as pl
from jax.experimental.pallas import tpu as pltpu


def _round_up(x, m):
    return ((x + m - 1) // m) * m


# ---------------------------------------------------------------------------
# Pallas kernel: band-local im2col + single GEMM + folded-BN bias + Mish
# ---------------------------------------------------------------------------
def _cba_kernel(x_ref, h_ref, w_ref, b_ref, o_ref, col_ref, *, k, s, Wq):
    # x_ref   : (1, s*s, C_in, tq)       bf16  phase-split flat-spatial tile
    # h_ref   : (1, s*s, C_in, halo_blk) bf16  right halo of the tile
    # w_ref   : (C_out, k*k*C_in)        bf16  BN-scale-folded weights (tap-major)
    # b_ref   : (C_out, 1)               f32   folded BN bias
    # o_ref   : (1, C_out, tq)           bf16  lane-dense output tile
    # col_ref : (k*k*C_in, tq)           bf16  band-local im2col scratch (VMEM)
    c_in = x_ref.shape[2]
    tq = col_ref.shape[1]

    # Stage the k*k taps into the im2col scratch.  Every slice offset is a
    # static Python int (the spatial tiling lives in the grid / BlockSpecs),
    # so no dynamic lane indexing and no big band lives in vregs.
    for kh in range(k):
        for kw in range(k):
            t = kh * k + kw
            ph = (kh % s) * s + (kw % s)          # phase image for this tap
            off = (kh // s) * Wq + (kw // s)      # flat shift inside the phase
            r0, r1 = t * c_in, (t + 1) * c_in
            if off == 0:
                col_ref[r0:r1, :] = x_ref[0, ph]
            else:
                col_ref[r0:r1, : tq - off] = x_ref[0, ph, :, off:]
                col_ref[r0:r1, tq - off:] = h_ref[0, ph, :, :off]

    # One MXU contraction per tile: (C_out, K) x (K, tq) -> (C_out, tq) f32.
    y = jnp.dot(w_ref[...], col_ref[...], preferred_element_type=jnp.float32)
    y = y + b_ref[...]                            # folded BN bias

    # Mish(y) = y * tanh(softplus(y)); tanh(softplus(y)) = t(t+2)/(t(t+2)+2).
    t_e = jnp.exp(jnp.minimum(y, 20.0))           # clamp: ratio -> 1, no overflow
    num = t_e * (t_e + 2.0)
    o_ref[0] = (y * num * pl.reciprocal(num + 2.0, approx=True)).astype(o_ref.dtype)


# ---------------------------------------------------------------------------
# Wrapper: layout prep (phase split, no HBM im2col), BN folding, pallas_call
# ---------------------------------------------------------------------------
def cba_forward(x_nchw, conv_w, bn_gamma, bn_beta, bn_mean, bn_var,
                *, stride=1, eps=1e-5, tq_max=1024):
    """CBA forward: conv2d(bias=False, pad=k//2, stride) -> BN(inference) -> Mish.

    x_nchw : (N, C_in, H, W)          conv_w : (C_out, C_in, k, k)
    returns: (N, C_out, H_out, W_out) float32 (PyTorch NCHW convention).
    """
    N, C_in, H, W = x_nchw.shape
    C_out, _, k, _ = conv_w.shape
    p = k // 2
    s = int(stride)

    Hp, Wp = H + 2 * p, W + 2 * p
    H_out = (Hp - k) // s + 1
    W_out = (Wp - k) // s + 1

    # Space-to-phase split: conv with stride s == stride-1 conv over s*s phase
    # images, so the kernel is stride-free (no s^2 wasted MACs / output bytes).
    Hp2, Wp2 = _round_up(Hp, s), _round_up(Wp, s)
    Hq, Wq = Hp2 // s, Wp2 // s
    P = s * s
    K = k * k * C_in
    Lq = Hq * Wq                                   # padded-width output positions

    # Flat lane-dense spatial tiling + a thin 128-aligned right-halo block.
    max_off = ((k - 1) // s) * (Wq + 1)            # largest tap shift
    halo_blk = _round_up(max(max_off, 1), 128)
    tq = min(_round_up(tq_max, 128), _round_up(Lq, 128))
    tq = _round_up(max(tq, 128), halo_blk)         # (r+1)*tq divisible by halo_blk
    if max_off >= tq:
        tq = _round_up(max_off + 1, halo_blk)
    nq = -(-Lq // tq)
    Lq_pad = nq * tq
    Lx_total = Lq_pad + halo_blk

    # ---- host-side prep (one pass over the input; no patch matrix) ---------
    inv_std = jax.lax.rsqrt(bn_var + eps)
    scale = bn_gamma * inv_std                                       # (C_out,)
    bias = (bn_beta - bn_mean * scale).reshape(C_out, 1).astype(jnp.float32)

    # (C_out, k, k, C_in) -> (C_out, K) tap-major; BN scale folded (conv is linear).
    w2 = jnp.transpose(conv_w, (0, 2, 3, 1)).reshape(C_out, K)
    w2 = (w2 * scale[:, None]).astype(jnp.bfloat16)

    xb = x_nchw.astype(jnp.bfloat16)
    xb = jnp.pad(xb, ((0, 0), (0, 0), (p, p + Hp2 - Hp), (p, p + Wp2 - Wp)))
    xb = xb.reshape(N, C_in, Hq, s, Wq, s)
    xb = jnp.transpose(xb, (0, 3, 5, 1, 2, 4))     # (N, s, s, C_in, Hq, Wq)
    xb = xb.reshape(N, P, C_in, Lq)
    xb = jnp.pad(xb, ((0, 0), (0, 0), (0, 0), (0, Lx_total - Lq)))   # tiny tail

    # ---- VMEM budget & cost hints -------------------------------------------
    try:
        vmem_cap = int(pltpu.get_tpu_info().vmem_capacity_bytes)
    except Exception:
        vmem_cap = 64 * 1024 * 1024                # v7x-safe fallback
    est = (2 * (2 * P * C_in * (tq + halo_blk)     # double-buffered input blocks
                + C_out * K                        # resident weights
                + 2 * C_out * tq                   # double-buffered output blocks
                + K * tq)                          # im2col scratch
           + 2 * C_out * 128 * 4)                  # bias (lane padded)
    vmem_limit = int(min(max(4 * est, 32 * 1024 * 1024), int(vmem_cap * 0.85)))

    cost = pl.CostEstimate(
        flops=int(2 * N * Lq_pad * K * C_out),
        transcendentals=int(N * Lq_pad * C_out),    # one exp per output element
        bytes_accessed=int(xb.size * 2 + N * nq * P * C_in * halo_blk * 2
                           + w2.size * 2 + bias.size * 4
                           + N * C_out * Lq_pad * 2))

    kernel = functools.partial(_cba_kernel, k=k, s=s, Wq=Wq)
    halo_step = tq // halo_blk                      # halo block-index stride

    out_flat = pl.pallas_call(
        kernel,
        out_shape=jax.ShapeDtypeStruct((N, C_out, Lq_pad), jnp.bfloat16),
        grid_spec=pltpu.PrefetchScalarGridSpec(
            num_scalar_prefetch=0,
            grid=(N, nq),
            in_specs=[
                pl.BlockSpec((1, P, C_in, tq), lambda n, r: (n, 0, 0, r)),
                pl.BlockSpec((1, P, C_in, halo_blk),
                             lambda n, r: (n, 0, 0, (r + 1) * halo_step)),
                pl.BlockSpec((C_out, K), lambda n, r: (0, 0)),
                pl.BlockSpec((C_out, 1), lambda n, r: (0, 0)),
            ],
            out_specs=pl.BlockSpec((1, C_out, tq), lambda n, r: (n, 0, r)),
            scratch_shapes=[pltpu.VMEM((K, tq), jnp.bfloat16)],
        ),
        compiler_params=pltpu.CompilerParams(
            dimension_semantics=("parallel", "arbitrary"),
            vmem_limit_bytes=vmem_limit),
        cost_estimate=cost,
    )(xb, xb, w2, bias)

    # Crop padded-width layout -> (N, C_out, H_out, W_out); the f32 cast rides
    # on the same (bf16-read) pass.
    out = out_flat[:, :, :Lq].reshape(N, C_out, Hq, Wq)
    return out[:, :, :H_out, :W_out].astype(jnp.float32)


# ---------------------------------------------------------------------------
# Pure-JAX reference (f32) for a sanity check
# ---------------------------------------------------------------------------
def cba_reference(x, conv_w, gamma, beta, mean, var, *, stride=1, eps=1e-5):
    k = conv_w.shape[-1]
    p = k // 2
    y = jax.lax.conv_general_dilated(
        x, conv_w, (stride, stride), ((p, p), (p, p)),
        dimension_numbers=("NCHW", "OIHW", "NCHW"))
    y = (y - mean[None, :, None, None]) * jax.lax.rsqrt(
        var[None, :, None, None] + eps)
    y = y * gamma[None, :, None, None] + beta[None, :, None, None]
    return y * jnp.tanh(jax.nn.softplus(y))       # mish


if __name__ == "__main__":
    # Shapes consistent with CBA(in_channels=4, out_channels=8, kernel_size=3)
    N, C_in, H, W = 2, 4, 16, 16
    C_out, k = 8, 3

    key = jax.random.PRNGKey(0)
    kx, kw_, kg, kb, km, kv = jax.random.split(key, 6)
    x = jax.random.normal(kx, (N, C_in, H, W), dtype=jnp.float32)
    conv_w = 0.1 * jax.random.normal(kw_, (C_out, C_in, k, k), dtype=jnp.float32)
    bn_gamma = 1.0 + 0.1 * jax.random.normal(kg, (C_out,), dtype=jnp.float32)
    bn_beta = 0.1 * jax.random.normal(kb, (C_out,), dtype=jnp.float32)
    bn_mean = 0.1 * jax.random.normal(km, (C_out,), dtype=jnp.float32)
    bn_var = jnp.abs(jax.random.normal(kv, (C_out,), dtype=jnp.float32)) + 0.5

    for s in (1, 2):
        fwd = jax.jit(functools.partial(cba_forward, stride=s))
        out = jax.block_until_ready(fwd(x, conv_w, bn_gamma, bn_beta,
                                        bn_mean, bn_var))
        ref = cba_reference(x, conv_w, bn_gamma, bn_beta, bn_mean, bn_var,
                            stride=s)
        assert out.shape == ref.shape, (out.shape, ref.shape)
        # bf16 MXU inputs + bf16 output + approx reciprocal vs all-f32 reference.
        np.testing.assert_allclose(np.asarray(out), np.asarray(ref),
                                   rtol=2e-2, atol=2e-2)

    print("KERNEL_OK")
</pallas_src>

<mosaic_0001>
module attributes {stable_mosaic.version = 11 : i64} {
  func.func @_cba_kernel(%arg0: i32, %arg1: i32, %arg2: memref<1x1x4x384xbf16, #tpu.memory_space<vmem>>, %arg3: memref<1x1x4x128xbf16, #tpu.memory_space<vmem>>, %arg4: memref<8x36xbf16, #tpu.memory_space<vmem>>, %arg5: memref<8x1xf32, #tpu.memory_space<vmem>>, %arg6: memref<1x8x384xbf16, #tpu.memory_space<vmem>>, %arg7: memref<36x384xbf16, #tpu.memory_space<vmem>>) attributes {dimension_semantics = [#tpu.dimension_semantics<parallel>, #tpu.dimension_semantics<arbitrary>], iteration_bounds = array<i64: 2, 1>, scalar_prefetch = 0 : i64, scratch_operands = 1 : i64, tpu.core_type = #tpu.core_type<tc>, window_params = [{transform_indices = @transform_0, window_bounds = array<i64: 1, 1, 4, 384>}, {transform_indices = @transform_1, window_bounds = array<i64: 1, 1, 4, 128>}, {pipeline_mode = #tpu.pipeline_mode<synchronous>, transform_indices = @transform_2, window_bounds = array<i64: 8, 36>}, {pipeline_mode = #tpu.pipeline_mode<synchronous>, transform_indices = @transform_3, window_bounds = array<i64: 8, 1>}, {transform_indices = @transform_4, window_bounds = array<i64: 1, 8, 384>}]} {
    %c0 = arith.constant 0 : index
    %c0_0 = arith.constant 0 : index
    %c0_1 = arith.constant 0 : index
    %c0_2 = arith.constant 0 : index
    %0 = vector.load %arg2[%c0, %c0_0, %c0_1, %c0_2] : memref<1x1x4x384xbf16, #tpu.memory_space<vmem>>, vector<1x1x4x384xbf16>
    %1 = vector.shape_cast %0 : vector<1x1x4x384xbf16> to vector<4x384xbf16>
    %c0_3 = arith.constant 0 : index
    %c0_4 = arith.constant 0 : index
    %2 = vector.load %arg7[%c0_3, %c0_4] : memref<36x384xbf16, #tpu.memory_space<vmem>>, vector<4x384xbf16>
    tpu.vector_store %arg7[%c0_3, %c0_4], %1 {strides = array<i32>} : memref<36x384xbf16, #tpu.memory_space<vmem>>, vector<4x384xbf16>,
    %c0_5 = arith.constant 0 : index
    %c0_6 = arith.constant 0 : index
    %c0_7 = arith.constant 0 : index
    %c1 = arith.constant 1 : index
    %3 = vector.load %arg2[%c0_5, %c0_6, %c0_7, %c1] : memref<1x1x4x384xbf16, #tpu.memory_space<vmem>>, vector<1x1x4x383xbf16>
    %4 = vector.shape_cast %3 : vector<1x1x4x383xbf16> to vector<4x383xbf16>
    %c4 = arith.constant 4 : index
    %c0_8 = arith.constant 0 : index
    %5 = vector.load %arg7[%c4, %c0_8] : memref<36x384xbf16, #tpu.memory_space<vmem>>, vector<4x383xbf16>
    tpu.vector_store %arg7[%c4, %c0_8], %4 {strides = array<i32>} : memref<36x384xbf16, #tpu.memory_space<vmem>>, vector<4x383xbf16>,
    %c0_9 = arith.constant 0 : index
    %c0_10 = arith.constant 0 : index
    %c0_11 = arith.constant 0 : index
    %c0_12 = arith.constant 0 : index
    %6 = vector.load %arg3[%c0_9, %c0_10, %c0_11, %c0_12] : memref<1x1x4x128xbf16, #tpu.memory_space<vmem>>, vector<1x1x4x1xbf16>
    %7 = vector.shape_cast %6 : vector<1x1x4x1xbf16> to vector<4x1xbf16>
    %c4_13 = arith.constant 4 : index
    %c383 = arith.constant 383 : index
    %8 = vector.load %arg7[%c4_13, %c383] : memref<36x384xbf16, #tpu.memory_space<vmem>>, vector<4x1xbf16>
    tpu.vector_store %arg7[%c4_13, %c383], %7 {strides = array<i32>} : memref<36x384xbf16, #tpu.memory_space<vmem>>, vector<4x1xbf16>,
    %c0_14 = arith.constant 0 : index
    %c0_15 = arith.constant 0 : index
    %c0_16 = arith.constant 0 : index
    %c2 = arith.constant 2 : index
    %9 = vector.load %arg2[%c0_14, %c0_15, %c0_16, %c2] : memref<1x1x4x384xbf16, #tpu.memory_space<vmem>>, vector<1x1x4x382xbf16>
    %10 = vector.shape_cast %9 : vector<1x1x4x382xbf16> to vector<4x382xbf16>
    %c8 = arith.constant 8 : index
    %c0_17 = arith.constant 0 : index
    %11 = vector.load %arg7[%c8, %c0_17] : memref<36x384xbf16, #tpu.memory_space<vmem>>, vector<4x382xbf16>
    tpu.vector_store %arg7[%c8, %c0_17], %10 {strides = array<i32>} : memref<36x384xbf16, #tpu.memory_space<vmem>>, vector<4x382xbf16>,
    %c0_18 = arith.constant 0 : index
    %c0_19 = arith.constant 0 : index
    %c0_20 = arith.constant 0 : index
    %c0_21 = arith.constant 0 : index
    %12 = vector.load %arg3[%c0_18, %c0_19, %c0_20, %c0_21] : memref<1x1x4x128xbf16, #tpu.memory_space<vmem>>, vector<1x1x4x2xbf16>
    %13 = vector.shape_cast %12 : vector<1x1x4x2xbf16> to vector<4x2xbf16>
    %c8_22 = arith.constant 8 : index
    %c382 = arith.constant 382 : index
    %14 = vector.load %arg7[%c8_22, %c382] : memref<36x384xbf16, #tpu.memory_space<vmem>>, vector<4x2xbf16>
    tpu.vector_store %arg7[%c8_22, %c382], %13 {strides = array<i32>} : memref<36x384xbf16, #tpu.memory_space<vmem>>, vector<4x2xbf16>,
    %c0_23 = arith.constant 0 : index
    %c0_24 = arith.constant 0 : index
    %c0_25 = arith.constant 0 : index
    %c18 = arith.constant 18 : index
    %15 = vector.load %arg2[%c0_23, %c0_24, %c0_25, %c18] : memref<1x1x4x384xbf16, #tpu.memory_space<vmem>>, vector<1x1x4x366xbf16>
    %16 = vector.shape_cast %15 : vector<1x1x4x366xbf16> to vector<4x366xbf16>
    %c12 = arith.constant 12 : index
    %c0_26 = arith.constant 0 : index
    %17 = vector.load %arg7[%c12, %c0_26] : memref<36x384xbf16, #tpu.memory_space<vmem>>, vector<4x366xbf16>
    tpu.vector_store %arg7[%c12, %c0_26], %16 {strides = array<i32>} : memref<36x384xbf16, #tpu.memory_space<vmem>>, vector<4x366xbf16>,
    %c0_27 = arith.constant 0 : index
    %c0_28 = arith.constant 0 : index
    %c0_29 = arith.constant 0 : index
    %c0_30 = arith.constant 0 : index
    %18 = vector.load %arg3[%c0_27, %c0_28, %c0_29, %c0_30] : memref<1x1x4x128xbf16, #tpu.memory_space<vmem>>, vector<1x1x4x18xbf16>
    %19 = vector.shape_cast %18 : vector<1x1x4x18xbf16> to vector<4x18xbf16>
    %c12_31 = arith.constant 12 : index
    %c366 = arith.constant 366 : index
    %20 = vector.load %arg7[%c12_31, %c366] : memref<36x384xbf16, #tpu.memory_space<vmem>>, vector<4x18xbf16>
    tpu.vector_store %arg7[%c12_31, %c366], %19 {strides = array<i32>} : memref<36x384xbf16, #tpu.memory_space<vmem>>, vector<4x18xbf16>,
    %c0_32 = arith.constant 0 : index
    %c0_33 = arith.constant 0 : index
    %c0_34 = arith.constant 0 : index
    %c19 = arith.constant 19 : index
    %21 = vector.load %arg2[%c0_32, %c0_33, %c0_34, %c19] : memref<1x1x4x384xbf16, #tpu.memory_space<vmem>>, vector<1x1x4x365xbf16>
    %22 = vector.shape_cast %21 : vector<1x1x4x365xbf16> to vector<4x365xbf16>
    %c16 = arith.constant 16 : index
    %c0_35 = arith.constant 0 : index
    %23 = vector.load %arg7[%c16, %c0_35] : memref<36x384xbf16, #tpu.memory_space<vmem>>, vector<4x365xbf16>
    tpu.vector_store %arg7[%c16, %c0_35], %22 {strides = array<i32>} : memref<36x384xbf16, #tpu.memory_space<vmem>>, vector<4x365xbf16>,
    %c0_36 = arith.constant 0 : index
    %c0_37 = arith.constant 0 : index
    %c0_38 = arith.constant 0 : index
    %c0_39 = arith.constant 0 : index
    %24 = vector.load %arg3[%c0_36, %c0_37, %c0_38, %c0_39] : memref<1x1x4x128xbf16, #tpu.memory_space<vmem>>, vector<1x1x4x19xbf16>
    %25 = vector.shape_cast %24 : vector<1x1x4x19xbf16> to vector<4x19xbf16>
    %c16_40 = arith.constant 16 : index
    %c365 = arith.constant 365 : index
    %26 = vector.load %arg7[%c16_40, %c365] : memref<36x384xbf16, #tpu.memory_space<vmem>>, vector<4x19xbf16>
    tpu.vector_store %arg7[%c16_40, %c365], %25 {strides = array<i32>} : memref<36x384xbf16, #tpu.memory_space<vmem>>, vector<4x19xbf16>,
    %c0_41 = arith.constant 0 : index
    %c0_42 = arith.constant 0 : index
    %c0_43 = arith.constant 0 : index
    %c20 = arith.constant 20 : index
    %27 = vector.load %arg2[%c0_41, %c0_42, %c0_43, %c20] : memref<1x1x4x384xbf16, #tpu.memory_space<vmem>>, vector<1x1x4x364xbf16>
    %28 = vector.shape_cast %27 : vector<1x1x4x364xbf16> to vector<4x364xbf16>
    %c20_44 = arith.constant 20 : index
    %c0_45 = arith.constant 0 : index
    %29 = vector.load %arg7[%c20_44, %c0_45] : memref<36x384xbf16, #tpu.memory_space<vmem>>, vector<4x364xbf16>
    tpu.vector_store %arg7[%c20_44, %c0_45], %28 {strides = array<i32>} : memref<36x384xbf16, #tpu.memory_space<vmem>>, vector<4x364xbf16>,
    %c0_46 = arith.constant 0 : index
    %c0_47 = arith.constant 0 : index
    %c0_48 = arith.constant 0 : index
    %c0_49 = arith.constant 0 : index
    %30 = vector.load %arg3[%c0_46, %c0_47, %c0_48, %c0_49] : memref<1x1x4x128xbf16, #tpu.memory_space<vmem>>, vector<1x1x4x20xbf16>
    %31 = vector.shape_cast %30 : vector<1x1x4x20xbf16> to vector<4x20xbf16>
    %c20_50 = arith.constant 20 : index
    %c364 = arith.constant 364 : index
    %32 = vector.load %arg7[%c20_50, %c364] : memref<36x384xbf16, #tpu.memory_space<vmem>>, vector<4x20xbf16>
    tpu.vector_store %arg7[%c20_50, %c364], %31 {strides = array<i32>} : memref<36x384xbf16, #tpu.memory_space<vmem>>, vector<4x20xbf16>,
    %c0_51 = arith.constant 0 : index
    %c0_52 = arith.constant 0 : index
    %c0_53 = arith.constant 0 : index
    %c36 = arith.constant 36 : index
    %33 = vector.load %arg2[%c0_51, %c0_52, %c0_53, %c36] : memref<1x1x4x384xbf16, #tpu.memory_space<vmem>>, vector<1x1x4x348xbf16>
    %34 = vector.shape_cast %33 : vector<1x1x4x348xbf16> to vector<4x348xbf16>
    %c24 = arith.constant 24 : index
    %c0_54 = arith.constant 0 : index
    %35 = vector.load %arg7[%c24, %c0_54] : memref<36x384xbf16, #tpu.memory_space<vmem>>, vector<4x348xbf16>
    tpu.vector_store %arg7[%c24, %c0_54], %34 {strides = array<i32>} : memref<36x384xbf16, #tpu.memory_space<vmem>>, vector<4x348xbf16>,
    %c0_55 = arith.constant 0 : index
    %c0_56 = arith.constant 0 : index
    %c0_57 = arith.constant 0 : index
    %c0_58 = arith.constant 0 : index
    %36 = vector.load %arg3[%c0_55, %c0_56, %c0_57, %c0_58] : memref<1x1x4x128xbf16, #tpu.memory_space<vmem>>, vector<1x1x4x36xbf16>
    %37 = vector.shape_cast %36 : vector<1x1x4x36xbf16> to vector<4x36xbf16>
    %c24_59 = arith.constant 24 : index
    %c348 = arith.constant 348 : index
    %38 = vector.load %arg7[%c24_59, %c348] : memref<36x384xbf16, #tpu.memory_space<vmem>>, vector<4x36xbf16>
    tpu.vector_store %arg7[%c24_59, %c348], %37 {strides = array<i32>} : memref<36x384xbf16, #tpu.memory_space<vmem>>, vector<4x36xbf16>,
    %c0_60 = arith.constant 0 : index
    %c0_61 = arith.constant 0 : index
    %c0_62 = arith.constant 0 : index
    %c37 = arith.constant 37 : index
    %39 = vector.load %arg2[%c0_60, %c0_61, %c0_62, %c37] : memref<1x1x4x384xbf16, #tpu.memory_space<vmem>>, vector<1x1x4x347xbf16>
    %40 = vector.shape_cast %39 : vector<1x1x4x347xbf16> to vector<4x347xbf16>
    %c28 = arith.constant 28 : index
    %c0_63 = arith.constant 0 : index
    %41 = vector.load %arg7[%c28, %c0_63] : memref<36x384xbf16, #tpu.memory_space<vmem>>, vector<4x347xbf16>
    tpu.vector_store %arg7[%c28, %c0_63], %40 {strides = array<i32>} : memref<36x384xbf16, #tpu.memory_space<vmem>>, vector<4x347xbf16>,
    %c0_64 = arith.constant 0 : index
    %c0_65 = arith.constant 0 : index
    %c0_66 = arith.constant 0 : index
    %c0_67 = arith.constant 0 : index
    %42 = vector.load %arg3[%c0_64, %c0_65, %c0_66, %c0_67] : memref<1x1x4x128xbf16, #tpu.memory_space<vmem>>, vector<1x1x4x37xbf16>
    %43 = vector.shape_cast %42 : vector<1x1x4x37xbf16> to vector<4x37xbf16>
    %c28_68 = arith.constant 28 : index
    %c347 = arith.constant 347 : index
    %44 = vector.load %arg7[%c28_68, %c347] : memref<36x384xbf16, #tpu.memory_space<vmem>>, vector<4x37xbf16>
    tpu.vector_store %arg7[%c28_68, %c347], %43 {strides = array<i32>} : memref<36x384xbf16, #tpu.memory_space<vmem>>, vector<4x37xbf16>,
    %c0_69 = arith.constant 0 : index
    %c0_70 = arith.constant 0 : index
    %c0_71 = arith.constant 0 : index
    %c38 = arith.constant 38 : index
    %45 = vector.load %arg2[%c0_69, %c0_70, %c0_71, %c38] : memref<1x1x4x384xbf16, #tpu.memory_space<vmem>>, vector<1x1x4x346xbf16>
    %46 = vector.shape_cast %45 : vector<1x1x4x346xbf16> to vector<4x346xbf16>
    %c32 = arith.constant 32 : index
    %c0_72 = arith.constant 0 : index
    %47 = vector.load %arg7[%c32, %c0_72] : memref<36x384xbf16, #tpu.memory_space<vmem>>, vector<4x346xbf16>
    tpu.vector_store %arg7[%c32, %c0_72], %46 {strides = array<i32>} : memref<36x384xbf16, #tpu.memory_space<vmem>>, vector<4x346xbf16>,
    %c0_73 = arith.constant 0 : index
    %c0_74 = arith.constant 0 : index
    %c0_75 = arith.constant 0 : index
    %c0_76 = arith.constant 0 : index
    %48 = vector.load %arg3[%c0_73, %c0_74, %c0_75, %c0_76] : memref<1x1x4x128xbf16, #tpu.memory_space<vmem>>, vector<1x1x4x38xbf16>
    %49 = vector.shape_cast %48 : vector<1x1x4x38xbf16> to vector<4x38xbf16>
    %c32_77 = arith.constant 32 : index
    %c346 = arith.constant 346 : index
    %50 = vector.load %arg7[%c32_77, %c346] : memref<36x384xbf16, #tpu.memory_space<vmem>>, vector<4x38xbf16>
    tpu.vector_store %arg7[%c32_77, %c346], %49 {strides = array<i32>} : memref<36x384xbf16, #tpu.memory_space<vmem>>, vector<4x38xbf16>,
    %c0_78 = arith.constant 0 : index
    %c0_79 = arith.constant 0 : index
    %51 = vector.load %arg4[%c0_78, %c0_79] : memref<8x36xbf16, #tpu.memory_space<vmem>>, vector<8x36xbf16>
    %c0_80 = arith.constant 0 : index
    %c0_81 = arith.constant 0 : index
    %52 = vector.load %arg7[%c0_80, %c0_81] : memref<36x384xbf16, #tpu.memory_space<vmem>>, vector<36x384xbf16>
    %cst = arith.constant dense<0.000000e+00> : vector<8x384xf32>
    %53 = tpu.matmul %51, %52, %cst {dimension_numbers = #tpu.dot_dimension_numbers<[1], [0], [0], [1], [0, 0, 1, 1], [], []>} : vector<8x36xbf16>, vector<36x384xbf16>, vector<8x384xf32> -> vector<8x384xf32>
    %c0_82 = arith.constant 0 : index
    %c0_83 = arith.constant 0 : index
    %54 = vector.load %arg5[%c0_82, %c0_83] : memref<8x1xf32, #tpu.memory_space<vmem>>, vector<8x1xf32>
    %55 = vector.broadcast %54 : vector<8x1xf32> to vector<8x384xf32>
    %56 = arith.addf %53, %55 : vector<8x384xf32>
    %cst_84 = arith.constant 2.000000e+01 : f32
    %57 = vector.broadcast %cst_84 : f32 to vector<8x384xf32>
    %58 = arith.minimumf %56, %57 : vector<8x384xf32>
    %59 = math.exp %58 : vector<8x384xf32>
    %cst_85 = arith.constant 2.000000e+00 : f32
    %60 = vector.broadcast %cst_85 : f32 to vector<8x384xf32>
    %61 = arith.addf %59, %60 : vector<8x384xf32>
    %62 = arith.mulf %59, %61 : vector<8x384xf32>
    %63 = arith.mulf %56, %62 : vector<8x384xf32>
    %cst_86 = arith.constant 2.000000e+00 : f32
    %64 = vector.broadcast %cst_86 : f32 to vector<8x384xf32>
    %65 = arith.addf %62, %64 : vector<8x384xf32>
    %66 = tpu.reciprocal %65 {approx = true} : vector<8x384xf32> -> vector<8x384xf32>
    %67 = arith.mulf %63, %66 : vector<8x384xf32>
    %68 = arith.truncf %67 : vector<8x384xf32> to vector<8x384xbf16>
    %c0_87 = arith.constant 0 : index
    %c0_88 = arith.constant 0 : index
    %c0_89 = arith.constant 0 : index
    %69 = vector.load %arg6[%c0_87, %c0_88, %c0_89] : memref<1x8x384xbf16, #tpu.memory_space<vmem>>, vector<1x8x384xbf16>
    %70 = vector.shape_cast %69 : vector<1x8x384xbf16> to vector<8x384xbf16>
    %71 = vector.shape_cast %68 : vector<8x384xbf16> to vector<1x8x384xbf16>
    tpu.vector_store %arg6[%c0_87, %c0_88, %c0_89], %71 {strides = array<i32>} : memref<1x8x384xbf16, #tpu.memory_space<vmem>>, vector<1x8x384xbf16>,
    return
  }
  func.func @transform_0(%arg0: i32, %arg1: i32) -> (i32, i32, i32, i32) {
    %c0_i32 = arith.constant 0 : i32
    %c0_i32_0 = arith.constant 0 : i32
    %c0_i32_1 = arith.constant 0 : i32
    return %arg0, %c0_i32, %c0_i32_0, %arg1 : i32, i32, i32, i32
  }
  func.func @transform_1(%arg0: i32, %arg1: i32) -> (i32, i32, i32, i32) {
    %c1_i32 = arith.constant 1 : i32
    %0 = arith.addi %arg1, %c1_i32 : i32
    %c3_i32 = arith.constant 3 : i32
    %1 = arith.muli %0, %c3_i32 : i32
    %c0_i32 = arith.constant 0 : i32
    %c0_i32_0 = arith.constant 0 : i32
    %c0_i32_1 = arith.constant 0 : i32
    return %arg0, %c0_i32, %c0_i32_0, %1 : i32, i32, i32, i32
  }
  func.func @transform_2(%arg0: i32, %arg1: i32) -> (i32, i32) {
    %c0_i32 = arith.constant 0 : i32
    %c0_i32_0 = arith.constant 0 : i32
    %c0_i32_1 = arith.constant 0 : i32
    return %c0_i32, %c0_i32_0 : i32, i32
  }
  func.func @transform_3(%arg0: i32, %arg1: i32) -> (i32, i32) {
    %c0_i32 = arith.constant 0 : i32
    %c0_i32_0 = arith.constant 0 : i32
    %c0_i32_1 = arith.constant 0 : i32
    return %c0_i32, %c0_i32_0 : i32, i32
  }
  func.func @transform_4(%arg0: i32, %arg1: i32) -> (i32, i32, i32) {
    %c0_i32 = arith.constant 0 : i32
    %c0_i32_0 = arith.constant 0 : i32
    return %arg0, %c0_i32, %arg1 : i32, i32, i32
  }
}

</mosaic_0001>

<llo_original>
// kernel: cba_forward.1
$region0: #{cba_forward.1}
  #allocation0 [shape = 'u32[]', space=smem, size = 0x4, offset = 0x4, fixed_abs, tag = 'smem constant byte address 0x4 - core index']
  #allocation1 [shape = 'u32[144,128]{1,0:T(1,128)}', space=vmem, size = 0x12000, scoped, tag = 'internal scratch']
  #allocation2 [shape = 'bf16[36,384]{1,0:T(8,128)(2,1)}', space=vmem, size = 0x7800, scoped, tag = 'scratch operand']
  %s0 = inlined_call_operand.vmem [shape: bf16[2,1,4,512], index: 0, kind: input, shape index: {}, may-alias: {0,1}]
  %s1 = inlined_call_operand.vmem [shape: bf16[2,1,4,512], index: 1, kind: input, shape index: {}, may-alias: {0,1}]
  %s2 = inlined_call_operand.vmem [shape: bf16[8,36], index: 2, kind: input, shape index: {}]
  %s3 = inlined_call_operand.vmem [shape: f32[8,1], index: 3, kind: input, shape index: {}]
  %s4 = inlined_call_operand.vmem [shape: bf16[2,8,384], index: 4, kind: output, shape index: {}]
  %s5 = sld [smem:[#allocation0]]
  $region49: #{cba_forward.1} parent=0
    _
  %s7 = ssub.s32 1, %s5
  %s8 = scalar_select 0, %s7, %s5
  loop: start=0, step=1, limit=4
  $region2: #{cba_forward.1} parent=0 // loop_pre_header
    _
  $region3: #{cba_forward.1} parent=0 // loop_header
    %s10 = sphi 0, %s14
    %p11 = scmp.ge.s32.totalorder %s10, 4
    %s17 = sphi 0, %s29
    %s18 = sphi 0, %s25
    %s19 = sphi 0, %s17
    %s20 = sphi 0, %s18
    %s21 = sphi 0, %s19
    %s22 = sphi 0, %s20
    %s34 = sphi 0, %s36
    %s37 = sphi 0, %s34
    %s38 = sphi 0, %s37
    %s54 = sphi 0, %s38
    %s66 = sphi 0, %s68
    %s69 = sphi 0, %s66
    %s70 = sphi 0, %s69
    %s86 = sphi 0, %s70
    %s90 = sphi 0, %s90
    %s92 = sphi 0, %s90
    %s93 = sphi 0, %s92
    %s107 = sphi 0, %s93
    %s111 = sphi 0, %s111
    %s113 = sphi 0, %s111
    %s114 = sphi 0, %s113
    %s128 = sphi 0, %s114
    %s136 = sphi 0, %s138
    %s139 = sphi 0, %s136
    %s140 = sphi 0, %s139
    %s156 = sphi 0, %s140
  $region4: #{cba_forward.1} parent=0 // loop_header_branch
    %13 = sbr.rel (%p11) target = $region8
  $region5: #{cba_forward.1} parent=0 // loop_body
    %s15 = ssub.s32 %s10, 1
    %s16 = ssub.s32 %s10, 2
    %s23 = sadd.s32 1, %s18
    %p24 = scmp.ge.s32.totalorder %s23, 1
    %s25 = scalar_select %p24, 0, %s23
    %s26 = sadd.s32 1, %s17
    %s27 = scalar_select %p24, %s26, %s17
    %p28 = scmp.ge.s32.totalorder %s27, 2
    %s29 = scalar_select %p28, 0, %s27
    %s30 = ssub.s32 %s17, %s29
    %s31 = ssub.s32 %s18, %s25
    %s32 = sor.u32 %s30, %s31
    %p33 = scmp.eq.s32.totalorder %s32, 0
    %s35 = sadd.s32 %s34, 1
    %s36 = scalar_select %p33, %s34, %s35
    %p39 = pneg %p33
    %p40 = scmp.eq.s32.totalorder %s10, 1
    %p41 = por %p39, %p40
    %p42 = scmp.ne.s32.totalorder %s34, %s37
    %p43 = scmp.eq.s32.totalorder %s10, 0
    %p44 = por %p42, %p43
    %p45 = scmp.ne.s32.totalorder %s34, %s37
    %p46 = scmp.eq.s32.totalorder %s15, 1
    %p47 = por %p45, %p46
    %p48 = scmp.ne.s32.totalorder %s37, %s38
    %p49 = scmp.eq.s32.totalorder %s15, 0
    %p50 = por %p48, %p49
    %p51 = scmp.ne.s32.totalorder %s37, %s38
    %p52 = scmp.eq.s32.totalorder %s16, 1
    %p53 = por %p51, %p52
    %p55 = scmp.ne.s32.totalorder %s38, %s54
    %p56 = scmp.eq.s32.totalorder %s16, 0
    %p57 = por %p55, %p56
    %s58 = sadd.s32 %s18, 1
    %s59 = smul.u32 %s58, 3
    %s60 = sadd.s32 %s25, 1
    %s61 = smul.u32 %s60, 3
    %s62 = ssub.s32 %s17, %s29
    %s63 = ssub.s32 %s59, %s61
    %s64 = sor.u32 %s62, %s63
    %p65 = scmp.eq.s32.totalorder %s64, 0
    %s67 = sadd.s32 %s66, 1
    %s68 = scalar_select %p65, %s66, %s67
    %p71 = pneg %p65
    %p72 = scmp.eq.s32.totalorder %s10, 1
    %p73 = por %p71, %p72
    %p74 = scmp.ne.s32.totalorder %s66, %s69
    %p75 = scmp.eq.s32.totalorder %s10, 0
    %p76 = por %p74, %p75
    %p77 = scmp.ne.s32.totalorder %s66, %s69
    %p78 = scmp.eq.s32.totalorder %s15, 1
    %p79 = por %p77, %p78
    %p80 = scmp.ne.s32.totalorder %s69, %s70
    %p81 = scmp.eq.s32.totalorder %s15, 0
    %p82 = por %p80, %p81
    %p83 = scmp.ne.s32.totalorder %s69, %s70
    %p84 = scmp.eq.s32.totalorder %s16, 1
    %p85 = por %p83, %p84
    %p87 = scmp.ne.s32.totalorder %s70, %s86
    %p88 = scmp.eq.s32.totalorder %s16, 0
    %p89 = por %p87, %p88
    %s91 = sadd.s32 %s90, 1
    %p94 = scmp.eq.s32.totalorder %s10, 1
    %p95 = scmp.ne.s32.totalorder %s90, %s92
    %p96 = scmp.eq.s32.totalorder %s10, 0
    %p97 = por %p95, %p96
    %p98 = scmp.ne.s32.totalorder %s90, %s92
    %p99 = scmp.eq.s32.totalorder %s15, 1
    %p100 = por %p98, %p99
    %p101 = scmp.ne.s32.totalorder %s92, %s93
    %p102 = scmp.eq.s32.totalorder %s15, 0
    %p103 = por %p101, %p102
    %p104 = scmp.ne.s32.totalorder %s92, %s93
    %p105 = scmp.eq.s32.totalorder %s16, 1
    %p106 = por %p104, %p105
    %p108 = scmp.ne.s32.totalorder %s93, %s107
    %p109 = scmp.eq.s32.totalorder %s16, 0
    %p110 = por %p108, %p109
    %s112 = sadd.s32 %s111, 1
    %p115 = scmp.eq.s32.totalorder %s10, 1
    %p116 = scmp.ne.s32.totalorder %s111, %s113
    %p117 = scmp.eq.s32.totalorder %s10, 0
    %p118 = por %p116, %p117
    %p119 = scmp.ne.s32.totalorder %s111, %s113
    %p120 = scmp.eq.s32.totalorder %s15, 1
    %p121 = por %p119, %p120
    %p122 = scmp.ne.s32.totalorder %s113, %s114
    %p123 = scmp.eq.s32.totalorder %s15, 0
    %p124 = por %p122, %p123
    %p125 = scmp.ne.s32.totalorder %s113, %s114
    %p126 = scmp.eq.s32.totalorder %s16, 1
    %p127 = por %p125, %p126
    %p129 = scmp.ne.s32.totalorder %s114, %s128
    %p130 = scmp.eq.s32.totalorder %s16, 0
    %p131 = por %p129, %p130
    %s132 = ssub.s32 %s17, %s29
    %s133 = ssub.s32 %s18, %s25
    %s134 = sor.u32 %s132, %s133
    %p135 = scmp.eq.s32.totalorder %s134, 0
    %s137 = sadd.s32 %s136, 1
    %s138 = scalar_select %p135, %s136, %s137
    %p141 = pneg %p135
    %p142 = scmp.eq.s32.totalorder %s10, 1
    %p143 = por %p141, %p142
    %p144 = scmp.ne.s32.totalorder %s136, %s139
    %p145 = scmp.eq.s32.totalorder %s10, 0
    %p146 = por %p144, %p145
    %p147 = scmp.ne.s32.totalorder %s136, %s139
    %p148 = scmp.eq.s32.totalorder %s15, 1
    %p149 = por %p147, %p148
    %p150 = scmp.ne.s32.totalorder %s139, %s140
    %p151 = scmp.eq.s32.totalorder %s15, 0
    %p152 = por %p150, %p151
    %p153 = scmp.ne.s32.totalorder %s139, %s140
    %p154 = scmp.eq.s32.totalorder %s16, 1
    %p155 = por %p153, %p154
    %p157 = scmp.ne.s32.totalorder %s140, %s156
    %p158 = scmp.eq.s32.totalorder %s16, 0
    %p159 = por %p157, %p158
    %p160 = scmp.le.s32.totalorder 1, %s10
    %p161 = scmp.lt.s32.totalorder %s10, 3
    %p162 = pnand %p160, %p161
    %p163 = pneg %p162
    // Predicated region
    $region9: #{cba_forward.1} parent=5 // pred_check
      _
    $region10: #{cba_forward.1} parent=5 // pred_check_branch
      %165 = sbr.rel (%p162) target = $region12
    $region11: #{cba_forward.1} parent=5 // pred_region
      %s166 = ssub.s32 %s10, 1
      // Predicated region
      $region13: #{cba_forward.1} parent=11 // pred_check
        %p167 = pneg %p103
      $region14: #{cba_forward.1} parent=11 // pred_check_branch
        %169 = sbr.rel (%p167) target = $region16
      $region15: #{cba_forward.1} parent=11 // pred_region
        _
      $region16: #{cba_forward.1} parent=11 // pred_fallthru
        _
      // Predicated region
      $region17: #{cba_forward.1} parent=11 // pred_check
        %p170 = pneg %p124
      $region18: #{cba_forward.1} parent=11 // pred_check_branch
        %172 = sbr.rel (%p170) target = $region20
      $region19: #{cba_forward.1} parent=11 // pred_region
        _
      $region20: #{cba_forward.1} parent=11 // pred_fallthru
        _
    $region12: #{cba_forward.1} parent=5 // pred_fallthru
      _
    %p173 = scmp.lt.s32.totalorder %s10, 2
    // Predicated region
    $region21: #{cba_forward.1} parent=5 // pred_check
      %p174 = pneg %p173
    $region22: #{cba_forward.1} parent=5 // pred_check_branch
      %176 = sbr.rel (%p174) target = $region24
    $region23: #{cba_forward.1} parent=5 // pred_region
      // Predicated region
      $region25: #{cba_forward.1} parent=23 // pred_check
        %p177 = pneg %p44
      $region26: #{cba_forward.1} parent=23 // pred_check_branch
        %179 = sbr.rel (%p177) target = $region28
      $region27: #{cba_forward.1} parent=23 // pred_region
        %s180 = smul.u32 3, %s18
        %s181 = ssub.s32 4, %s180
        %p182 = scmp.lt.s32.totalorder %s181, 3
        %s183 = scalar_select %p182, %s181, 3
        %s184 = smul.u32 32, %s183
        %p185 = scmp.lt.s32.totalorder %s17, 1
        %s186 = scalar_select %p185, %s17, 1
        %p187 = scmp.lt.s32.totalorder %s180, 3
        %s188 = scalar_select %p187, %s180, 3
        %s189 = smul.addr %s186, 4
        %s190 = sadd.s32 %s188, %s189
        %s191 = smul.addr %s190, 2
        %s192 = scalar_lea.vmem %s0, %s191
        %s193 = smul.u32 3, %s18
        %s194 = ssub.s32 4, %s193
        %p195 = scmp.lt.s32.totalorder %s194, 3
        %s196 = scalar_select %p195, %s194, 3
        %s197 = smul.u32 32, %s196
      $region28: #{cba_forward.1} parent=23 // pred_fallthru
        _
      // Predicated region
      $region29: #{cba_forward.1} parent=23 // pred_check
        %p198 = pneg %p76
      $region30: #{cba_forward.1} parent=23 // pred_check_branch
        %200 = sbr.rel (%p198) target = $region32
      $region31: #{cba_forward.1} parent=23 // pred_region
        %s201 = sadd.s32 %s18, 1
        %s202 = smul.u32 %s201, 3
        %p203 = scmp.lt.s32.totalorder %s17, 1
        %s204 = scalar_select %p203, %s17, 1
        %p205 = scmp.lt.s32.totalorder %s202, 3
        %s206 = scalar_select %p205, %s202, 3
        %s207 = smul.addr %s204, 4
        %s208 = sadd.s32 %s206, %s207
        %s209 = smul.addr %s208, 2
        %s210 = scalar_lea.vmem %s1, %s209
        %s211 = sadd.s32 %s18, 1
        %s212 = smul.u32 %s211, 3
      $region32: #{cba_forward.1} parent=23 // pred_fallthru
        _
    $region24: #{cba_forward.1} parent=5 // pred_fallthru
      _
    %p213 = scmp.le.s32.totalorder 1, %s10
    %p214 = scmp.lt.s32.totalorder %s10, 3
    %p215 = pnand %p213, %p214
    %p216 = pneg %p215
    // Predicated region
    $region33: #{cba_forward.1} parent=5 // pred_check
      _
    $region34: #{cba_forward.1} parent=5 // pred_check_branch
      %218 = sbr.rel (%p215) target = $region36
    $region35: #{cba_forward.1} parent=5 // pred_region
      %s219 = ssub.s32 %s10, 1
      %s220 = smul.u32 3, %s20
      %s221 = ssub.s32 4, %s220
      %p222 = scmp.lt.s32.totalorder %s221, 3
      %s223 = scalar_select %p222, %s221, 3
      %s224 = smul.u32 32, %s223
      %p225 = scmp.lt.s32.totalorder %s19, 1
      %s226 = scalar_select %p225, %s19, 1
      %p227 = scmp.lt.s32.totalorder %s220, 3
      %s228 = scalar_select %p227, %s220, 3
      %s229 = smul.addr %s226, 4
      %s230 = sadd.s32 %s228, %s229
      %s231 = smul.addr %s230, 2
      %s232 = scalar_lea.vmem %s0, %s231
      %p233 = pneg %p50
      %p234 = pneg %p47
      %s235 = sadd.s32 %s20, 1
      %s236 = smul.u32 %s235, 3
      %p237 = scmp.lt.s32.totalorder %s19, 1
      %s238 = scalar_select %p237, %s19, 1
      %p239 = scmp.lt.s32.totalorder %s236, 3
      %s240 = scalar_select %p239, %s236, 3
      %s241 = smul.addr %s238, 4
      %s242 = sadd.s32 %s240, %s241
      %s243 = smul.addr %s242, 2
      %s244 = scalar_lea.vmem %s1, %s243
      %p245 = pneg %p82
      %p246 = pneg %p79
      %p247 = pneg %p103
      %p248 = pneg %p100
      %p249 = pneg %p124
      %p250 = pneg %p121
      %p251 = pneg %p152
      %p252 = pneg %p149
      %s253 = smul.u32 3, %s20
      %p254 = scmp.lt.s32.totalorder %s19, 1
      %s255 = scalar_select %p254, %s19, 1
      %p256 = scmp.lt.s32.totalorder %s253, 2
      %s257 = scalar_select %p256, %s253, 2
      %s258 = smul.addr %s255, 3
      %s259 = sadd.s32 %s257, %s258
      %s260 = smul.addr %s259, 4
      %s261 = scalar_lea.vmem %s4, %s260
      %s262 = smul.u32 3, %s20
      %s263 = ssub.s32 4, %s262
      %p264 = scmp.lt.s32.totalorder %s263, 3
      %s265 = scalar_select %p264, %s263, 3
      %s266 = smul.u32 32, %s265
      %p267 = scmp.lt.s32.totalorder %s19, 1
      %s268 = scalar_select %p267, %s19, 1
      %p269 = scmp.lt.s32.totalorder %s262, 3
      %s270 = scalar_select %p269, %s262, 3
      %s271 = smul.addr %s268, 4
      %s272 = sadd.s32 %s270, %s271
      %s273 = smul.addr %s272, 2
      %s274 = scalar_lea.vmem %s0, %s273
      %s275 = smul.u32 3, %s20
      %s276 = ssub.s32 4, %s275
      %p277 = scmp.lt.s32.totalorder %s276, 3
      %s278 = scalar_select %p277, %s276, 3
      %s279 = smul.u32 32, %s278
      %s280 = sadd.s32 %s20, 1
      %s281 = smul.u32 %s280, 3
      %p282 = scmp.lt.s32.totalorder %s19, 1
      %s283 = scalar_select %p282, %s19, 1
      %p284 = scmp.lt.s32.totalorder %s281, 3
      %s285 = scalar_select %p284, %s281, 3
      %s286 = smul.addr %s283, 4
      %s287 = sadd.s32 %s285, %s286
      %s288 = smul.addr %s287, 2
      %s289 = scalar_lea.vmem %s1, %s288
      %s290 = sadd.s32 %s20, 1
      %s291 = smul.u32 %s290, 3
      %s292 = smul.u32 3, %s20
      %p293 = scmp.lt.s32.totalorder %s19, 1
      %s294 = scalar_select %p293, %s19, 1
      %p295 = scmp.lt.s32.totalorder %s292, 2
      %s296 = scalar_select %p295, %s292, 2
      %s297 = smul.addr %s294, 3
      %s298 = sadd.s32 %s296, %s297
      %s299 = smul.addr %s298, 4
      %s300 = scalar_lea.vmem %s4, %s299
      %s301 = smul.u32 3, %s20
      %v303 = vld [vmem:[%s274] sm:$0x3f]
      %v305 = vcombine.high %v303, %v303
      %v307 = vunpack.c.l.s4 1983009808
      %v308 = vunpack.c.0.s8 %v307
      %v309 = vlaneseq
      %v310 = vshrl.u32 %v309, 7
      %v311 = vsub.s32 %v308, %v310
      %v312 = vrot.slane %v303, %v311
      %v314 = vunpack.c.l.s4 1983009808
      %v315 = vunpack.c.0.s8 %v314
      %v316 = vlaneseq
      %v317 = vshrl.u32 %v316, 7
      %v318 = vsub.s32 %v315, %v317
      %v319 = vrot.slane %v305, %v318
      %322 = vst [vmem:[#allocation2] sm:$0x33] %v312
      %323 = vst [vmem:[#allocation2 + $0x8] sm:$0x3] %v319
      %v324 = vld [vmem:[%s274] sm:$0x3f]
      %v326 = vcombine.low %v324, %v324
      %v328 = vunpack.c.l.s4 1983009808
      %v329 = vunpack.c.0.s8 %v328
      %v330 = vlaneseq
      %v331 = vshrl.u32 %v330, 7
      %v332 = vsub.s32 %v329, %v331
      %v333 = vrot.slane %v326, %v332
      %v335 = vunpack.c.l.s4 1983009808
      %v336 = vunpack.c.0.s8 %v335
      %v337 = vlaneseq
      %v338 = vshrl.u32 %v337, 7
      %v339 = vsub.s32 %v336, %v338
      %v340 = vrot.slane %v324, %v339
      %341 = vrot.lane.b32.xlu0 %v333, 127
      %v342 = vpop.permute.xlu0 %341
      %343 = vrot.lane.b32.xlu0 %v340, 127
      %v344 = vpop.permute.xlu0 %343
      %v345 = vrot.slane %v342, 4
      %v346 = vrot.slane %v344, 4
      %vm347 = vcmask 1043456
      %v348 = vsel %vm347, %v345, %v346
      %vm349 = vcmask 1039360
      %v350 = vsel %vm349, %v342, %v348
      %353 = vst [vmem:[#allocation2] sm:$0xcc] %v350
      %vm354 = vcmask 1035266
      %355 = vst.msk [vmem:[#allocation2 + $0x8] sm:$0xc] %vm354, %v344
      %v356 = vld [vmem:[%s289] sm:$0x3]
      %v358 = vcombine.low %v356, %v356
      %v360 = vunpack.c.l.s4 1983009808
      %v361 = vunpack.c.0.s8 %v360
      %v362 = vlaneseq
      %v363 = vshrl.u32 %v362, 7
      %v364 = vsub.s32 %v361, %v363
      %v365 = vrot.slane %v358, %v364
      %366 = vrot.lane.b32.xlu0 %v365, 127
      %v367 = vpop.permute.xlu0 %366
      %vm369 = vcmask 1044474
      %370 = vst.msk [vmem:[#allocation2 + $0x8] sm:$0xc] %vm369, %v367
      %v371 = vld [vmem:[%s274] sm:$0x3f]
      %v373 = vcombine.high %v371, %v371
      %v375 = vunpack.c.l.s4 1983009808
      %v376 = vunpack.c.0.s8 %v375
      %v377 = vlaneseq
      %v378 = vshrl.u32 %v377, 7
      %v379 = vsub.s32 %v376, %v378
      %v380 = vrot.slane %v371, %v379
      %v382 = vunpack.c.l.s4 1983009808
      %v383 = vunpack.c.0.s8 %v382
      %v384 = vlaneseq
      %v385 = vshrl.u32 %v384, 7
      %v386 = vsub.s32 %v383, %v385
      %v387 = vrot.slane %v373, %v386
      %388 = vrot.lane.b32.xlu0 %v380, 126
      %v389 = vpop.permute.xlu0 %388
      %390 = vrot.lane.b32.xlu0 %v387, 126
      %v391 = vpop.permute.xlu0 %390
      %v392 = vrot.slane %v389, 4
      %v393 = vrot.slane %v391, 4
      %v394 = vsel %vm347, %v392, %v393
      %vm395 = vcmask 1031168
      %v396 = vsel %vm395, %v389, %v394
      %399 = vst [vmem:[#allocation2 + $0xc] sm:$0x33] %v396
      %vm400 = vcmask 1025024
      %401 = vst.msk [vmem:[#allocation2 + $0x14] sm:$0x3] %vm400, %v391
      %v402 = vld [vmem:[%s289] sm:$0x3]
      %v405 = vunpack.c.l.s4 1983009808
      %v406 = vunpack.c.0.s8 %v405
      %v407 = vlaneseq
      %v408 = vshrl.u32 %v407, 7
      %v409 = vsub.s32 %v406, %v408
      %v410 = vrot.slane %v402, %v409
      %411 = vrot.lane.b32.xlu0 %v410, 126
      %v412 = vpop.permute.xlu0 %411
      %vm414 = vcmask 1042416
      %415 = vst.msk [vmem:[#allocation2 + $0x14] sm:$0x3] %vm414, %v412
      %v416 = vld [vmem:[%s274] sm:$0x3f]
      %v418 = vcombine.low %v416, %v416
      %v420 = vunpack.c.l.s4 1983009808
      %v421 = vunpack.c.0.s8 %v420
      %v422 = vlaneseq
      %v423 = vshrl.u32 %v422, 7
      %v424 = vsub.s32 %v421, %v423
      %v425 = vrot.slane %v418, %v424
      %v427 = vunpack.c.l.s4 1983009808
      %v428 = vunpack.c.0.s8 %v427
      %v429 = vlaneseq
      %v430 = vshrl.u32 %v429, 7
      %v431 = vsub.s32 %v428, %v430
      %v432 = vrot.slane %v416, %v431
      %433 = vrot.lane.b32.xlu0 %v425, 110
      %v434 = vpop.permute.xlu0 %433
      %435 = vrot.lane.b32.xlu0 %v432, 110
      %v436 = vpop.permute.xlu0 %435
      %v437 = vrot.slane %v434, 4
      %v438 = vrot.slane %v436, 4
      %v439 = vsel %vm347, %v437, %v438
      %vm440 = vcmask 900096
      %v441 = vsel %vm440, %v434, %v439
      %444 = vst [vmem:[#allocation2 + $0xc] sm:$0xcc] %v441
      %vm445 = vcmask 896002
      %446 = vst.msk [vmem:[#allocation2 + $0x14] sm:$0xc] %vm445, %v436
      %v447 = vld [vmem:[%s289] sm:$0x3]
      %v449 = vcombine.low %v447, %v447
      %v451 = vunpack.c.l.s4 1983009808
      %v452 = vunpack.c.0.s8 %v451
      %v453 = vlaneseq
      %v454 = vshrl.u32 %v453, 7
      %v455 = vsub.s32 %v452, %v454
      %v456 = vrot.slane %v449, %v455
      %457 = vrot.lane.b32.xlu0 %v456, 110
      %v458 = vpop.permute.xlu0 %457
      %vm460 = vcmask 1044338
      %461 = vst.msk [vmem:[#allocation2 + $0x14] sm:$0xc] %vm460, %v458
      %v462 = vld [vmem:[%s274] sm:$0x3f]
      %v464 = vcombine.high %v462, %v462
      %v466 = vunpack.c.l.s4 1983009808
      %v467 = vunpack.c.0.s8 %v466
      %v468 = vlaneseq
      %v469 = vshrl.u32 %v468, 7
      %v470 = vsub.s32 %v467, %v469
      %v471 = vrot.slane %v462, %v470
      %v473 = vunpack.c.l.s4 1983009808
      %v474 = vunpack.c.0.s8 %v473
      %v475 = vlaneseq
      %v476 = vshrl.u32 %v475, 7
      %v477 = vsub.s32 %v474, %v476
      %v478 = vrot.slane %v464, %v477
      %479 = vrot.lane.b32.xlu0 %v471, 109
      %v480 = vpop.permute.xlu0 %479
      %481 = vrot.lane.b32.xlu0 %v478, 109
      %v482 = vpop.permute.xlu0 %481
      %v483 = vrot.slane %v480, 4
      %v484 = vrot.slane %v482, 4
      %v485 = vsel %vm347, %v483, %v484
      %vm486 = vcmask 891904
      %v487 = vsel %vm486, %v480, %v485
      %490 = vst [vmem:[#allocation2 + $0x18] sm:$0x33] %v487
      %vm491 = vcmask 885760
      %492 = vst.msk [vmem:[#allocation2 + $0x20] sm:$0x3] %vm491, %v482
      %v493 = vld [vmem:[%s289] sm:$0x3]
      %v496 = vunpack.c.l.s4 1983009808
      %v497 = vunpack.c.0.s8 %v496
      %v498 = vlaneseq
      %v499 = vshrl.u32 %v498, 7
      %v500 = vsub.s32 %v497, %v499
      %v501 = vrot.slane %v493, %v500
      %502 = vrot.lane.b32.xlu0 %v501, 109
      %v503 = vpop.permute.xlu0 %502
      %vm505 = vcmask 1042280
      %506 = vst.msk [vmem:[#allocation2 + $0x20] sm:$0x3] %vm505, %v503
      %v507 = vld [vmem:[%s274] sm:$0x3f]
      %v509 = vcombine.low %v507, %v507
      %v511 = vunpack.c.l.s4 1983009808
      %v512 = vunpack.c.0.s8 %v511
      %v513 = vlaneseq
      %v514 = vshrl.u32 %v513, 7
      %v515 = vsub.s32 %v512, %v514
      %v516 = vrot.slane %v509, %v515
      %v518 = vunpack.c.l.s4 1983009808
      %v519 = vunpack.c.0.s8 %v518
      %v520 = vlaneseq
      %v521 = vshrl.u32 %v520, 7
      %v522 = vsub.s32 %v519, %v521
      %v523 = vrot.slane %v507, %v522
      %524 = vrot.lane.b32.xlu0 %v516, 108
      %v525 = vpop.permute.xlu0 %524
      %526 = vrot.lane.b32.xlu0 %v523, 108
      %v527 = vpop.permute.xlu0 %526
      %v528 = vrot.slane %v525, 4
      %v529 = vrot.slane %v527, 4
      %v530 = vsel %vm347, %v528, %v529
      %vm531 = vcmask 883712
      %v532 = vsel %vm531, %v525, %v530
      %535 = vst [vmem:[#allocation2 + $0x18] sm:$0xcc] %v532
      %vm536 = vcmask 879618
      %537 = vst.msk [vmem:[#allocation2 + $0x20] sm:$0xc] %vm536, %v527
      %v538 = vld [vmem:[%s289] sm:$0x3]
      %v540 = vcombine.low %v538, %v538
      %v542 = vunpack.c.l.s4 1983009808
      %v543 = vunpack.c.0.s8 %v542
      %v544 = vlaneseq
      %v545 = vshrl.u32 %v544, 7
      %v546 = vsub.s32 %v543, %v545
      %v547 = vrot.slane %v540, %v546
      %548 = vrot.lane.b32.xlu0 %v547, 108
      %v549 = vpop.permute.xlu0 %548
      %vm551 = vcmask 1044322
      %552 = vst.msk [vmem:[#allocation2 + $0x20] sm:$0xc] %vm551, %v549
      %v553 = vld [vmem:[%s274] sm:$0x3f]
      %v555 = vcombine.high %v553, %v553
      %v557 = vunpack.c.l.s4 1983009808
      %v558 = vunpack.c.0.s8 %v557
      %v559 = vlaneseq
      %v560 = vshrl.u32 %v559, 7
      %v561 = vsub.s32 %v558, %v560
      %v562 = vrot.slane %v553, %v561
      %v564 = vunpack.c.l.s4 1983009808
      %v565 = vunpack.c.0.s8 %v564
      %v566 = vlaneseq
      %v567 = vshrl.u32 %v566, 7
      %v568 = vsub.s32 %v565, %v567
      %v569 = vrot.slane %v555, %v568
      %570 = vrot.lane.b32.xlu0 %v562, 92
      %v571 = vpop.permute.xlu0 %570
      %572 = vrot.lane.b32.xlu0 %v569, 92
      %v573 = vpop.permute.xlu0 %572
      %v574 = vrot.slane %v571, 4
      %v575 = vrot.slane %v573, 4
      %v576 = vsel %vm347, %v574, %v575
      %vm577 = vcmask 752640
      %v578 = vsel %vm577, %v571, %v576
      %581 = vst [vmem:[#allocation2 + $0x24] sm:$0x33] %v578
      %vm582 = vcmask 746496
      %583 = vst.msk [vmem:[#allocation2 + $0x2c] sm:$0x3] %vm582, %v573
      %v584 = vld [vmem:[%s289] sm:$0x3]
      %v587 = vunpack.c.l.s4 1983009808
      %v588 = vunpack.c.0.s8 %v587
      %v589 = vlaneseq
      %v590 = vshrl.u32 %v589, 7
      %v591 = vsub.s32 %v588, %v590
      %v592 = vrot.slane %v584, %v591
      %593 = vrot.lane.b32.xlu0 %v592, 92
      %v594 = vpop.permute.xlu0 %593
      %vm596 = vcmask 1042144
      %597 = vst.msk [vmem:[#allocation2 + $0x2c] sm:$0x3] %vm596, %v594
      %v598 = vld [vmem:[%s274] sm:$0x3f]
      %v600 = vcombine.low %v598, %v598
      %v602 = vunpack.c.l.s4 1983009808
      %v603 = vunpack.c.0.s8 %v602
      %v604 = vlaneseq
      %v605 = vshrl.u32 %v604, 7
      %v606 = vsub.s32 %v603, %v605
      %v607 = vrot.slane %v600, %v606
      %v609 = vunpack.c.l.s4 1983009808
      %v610 = vunpack.c.0.s8 %v609
      %v611 = vlaneseq
      %v612 = vshrl.u32 %v611, 7
      %v613 = vsub.s32 %v610, %v612
      %v614 = vrot.slane %v598, %v613
      %615 = vrot.lane.b32.xlu0 %v607, 91
      %v616 = vpop.permute.xlu0 %615
      %617 = vrot.lane.b32.xlu0 %v614, 91
      %v618 = vpop.permute.xlu0 %617
      %v619 = vrot.slane %v616, 4
      %v620 = vrot.slane %v618, 4
      %v621 = vsel %vm347, %v619, %v620
      %vm622 = vcmask 744448
      %v623 = vsel %vm622, %v616, %v621
      %626 = vst [vmem:[#allocation2 + $0x24] sm:$0xcc] %v623
      %vm627 = vcmask 740354
      %628 = vst.msk [vmem:[#allocation2 + $0x2c] sm:$0xc] %vm627, %v618
      %v629 = vld [vmem:[%s289] sm:$0x3]
      %v631 = vcombine.low %v629, %v629
      %v633 = vunpack.c.l.s4 1983009808
      %v634 = vunpack.c.0.s8 %v633
      %v635 = vlaneseq
      %v636 = vshrl.u32 %v635, 7
      %v637 = vsub.s32 %v634, %v636
      %v638 = vrot.slane %v631, %v637
      %639 = vrot.lane.b32.xlu0 %v638, 91
      %v640 = vpop.permute.xlu0 %639
      %vm642 = vcmask 1044186
      %643 = vst.msk [vmem:[#allocation2 + $0x2c] sm:$0xc] %vm642, %v640
      %v644 = vld [vmem:[%s274] sm:$0x3f]
      %v646 = vcombine.high %v644, %v644
      %v648 = vunpack.c.l.s4 1983009808
      %v649 = vunpack.c.0.s8 %v648
      %v650 = vlaneseq
      %v651 = vshrl.u32 %v650, 7
      %v652 = vsub.s32 %v649, %v651
      %v653 = vrot.slane %v644, %v652
      %v655 = vunpack.c.l.s4 1983009808
      %v656 = vunpack.c.0.s8 %v655
      %v657 = vlaneseq
      %v658 = vshrl.u32 %v657, 7
      %v659 = vsub.s32 %v656, %v658
      %v660 = vrot.slane %v646, %v659
      %661 = vrot.lane.b32.xlu0 %v653, 90
      %v662 = vpop.permute.xlu0 %661
      %663 = vrot.lane.b32.xlu0 %v660, 90
      %v664 = vpop.permute.xlu0 %663
      %v665 = vrot.slane %v662, 4
      %v666 = vrot.slane %v664, 4
      %v667 = vsel %vm347, %v665, %v666
      %vm668 = vcmask 736256
      %v669 = vsel %vm668, %v662, %v667
      %672 = vst [vmem:[#allocation2 + $0x30] sm:$0x33] %v669
      %vm673 = vcmask 730112
      %674 = vst.msk [vmem:[#allocation2 + $0x38] sm:$0x3] %vm673, %v664
      %v675 = vld [vmem:[%s289] sm:$0x3]
      %v678 = vunpack.c.l.s4 1983009808
      %v679 = vunpack.c.0.s8 %v678
      %v680 = vlaneseq
      %v681 = vshrl.u32 %v680, 7
      %v682 = vsub.s32 %v679, %v681
      %v683 = vrot.slane %v675, %v682
      %684 = vrot.lane.b32.xlu0 %v683, 90
      %v685 = vpop.permute.xlu0 %684
      %vm687 = vcmask 1042128
      %688 = vst.msk [vmem:[#allocation2 + $0x38] sm:$0x3] %vm687, %v685
      %v689 = vld [vmem:[%s2] sm:$0xf]
      %v690 = vld [vmem:[#allocation2] sm:$0xff]
      %v691 = vld [vmem:[#allocation2 + $0x8] sm:$0xf]
      %v692 = vld [vmem:[#allocation2 + $0xc] sm:$0xff]
      %v693 = vld [vmem:[#allocation2 + $0x14] sm:$0xf]
      %v694 = vld [vmem:[#allocation2 + $0x18] sm:$0xff]
      %v695 = vld [vmem:[#allocation2 + $0x20] sm:$0xf]
      %v696 = vld [vmem:[#allocation2 + $0x24] sm:$0xff]
      %v697 = vld [vmem:[#allocation2 + $0x2c] sm:$0xf]
      %v698 = vld [vmem:[#allocation2 + $0x30] sm:$0x33]
      %v699 = vld [vmem:[#allocation2 + $0x38] sm:$0x3]
      %v700 = vld [vmem:[%s3] sm:$0xff]
      %702 = vset.pattern.permute.xlu0 0
      %703 = vperm.xlu0 %702, %v700
      %v704 = vpop.permute.xlu0 %703
      %v716 = vunpack.c.l.b16 %v690
      %v717 = vunpack.c.h.b16 %v690
      %v718 = vunpack.c.l.b16 %v691
      %v719 = vunpack.c.l.b16 %v692
      %v720 = vunpack.c.h.b16 %v692
      %v721 = vunpack.c.l.b16 %v693
      %v722 = vunpack.c.l.b16 %v694
      %v723 = vunpack.c.h.b16 %v694
      %v724 = vunpack.c.l.b16 %v695
      %v725 = vunpack.c.l.b16 %v696
      %v726 = vunpack.c.h.b16 %v696
      %v727 = vunpack.c.l.b16 %v697
      %v728 = vunpack.c.l.b16 %v698
      %v729 = vunpack.c.h.b16 %v698
      %v730 = vunpack.c.l.b16 %v699
      %v731 = vpack.c.b16 %v719, %v716
      %v732 = vpack.c.b16 %v720, %v717
      %v733 = vpack.c.b16 %v721, %v718
      %v734 = vpack.c.b16 %v725, %v722
      %v735 = vpack.c.b16 %v726, %v723
      %v736 = vpack.c.b16 %v727, %v724
      %v737 = vpack.c.b16 %v728, %v728
      %v738 = vpack.c.b16 %v729, %v729
      %v739 = vpack.c.b16 %v730, %v730
      %vm746 = vcmask 293888
      %v748 = vsel %vm746, %v689, 0
      %vm750 = vcmask 1041408
      %v752 = vsel %vm750, %v737, 0
      %v755 = vsel %vm750, %v738, 0
      %v758 = vsel %vm750, %v739, 0
      %760 = vmatprep.subr.bf16.mxu0 %v732
      %761 = vmatpush1.bf16.msra.mxu0 %v731
      %762 = vmatprep.subr.bf16.mxu0 %v735
      %763 = vmatpush1.bf16.msra.mxu0 %v734
      %764 = vmatprep.subr.bf16.mxu0 %v755
      %765 = vmatpush1.bf16.msra.mxu0 %v752
      %766 = vmatprep.subr.bf16.mxu0 0
      %767 = vmatpush1.bf16.msra.mxu0 0
      %768 = vmatprep.subr.bf16.mxu0 0
      %769 = vmatpush1.bf16.msra.mxu0 0
      %770 = vmatprep.subr.bf16.mxu0 0
      %771 = vmatpush1.bf16.msra.mxu0 0
      %772 = vmatprep.subr.bf16.mxu0 0
      %773 = vmatpush1.bf16.msra.mxu0 0
      %774 = vmatprep.subr.bf16.mxu0 0
      %775 = vmatpush1.bf16.msra.mxu0 0
      %776 = vmatprep.subr.bf16.mxu0 0
      %777 = vmatpush1.bf16.msra.mxu0 0
      %778 = vmatprep.subr.bf16.mxu0 0
      %779 = vmatpush1.bf16.msra.mxu0 0
      %780 = vmatprep.subr.bf16.mxu0 0
      %781 = vmatpush1.bf16.msra.mxu0 0
      %782 = vmatprep.subr.bf16.mxu0 0
      %783 = vmatpush1.bf16.msra.mxu0 0
      %784 = vmatprep.subr.bf16.mxu0 0
      %785 = vmatpush1.bf16.msra.mxu0 0
      %786 = vmatprep.subr.bf16.mxu0 0
      %787 = vmatpush1.bf16.msra.mxu0 0
      %788 = vmatprep.subr.bf16.mxu0 0
      %789 = vmatpush1.bf16.msra.mxu0 0
      %790 = vmatprep.subr.bf16.mxu0 0
      %791 = vmatpush1.bf16.msra.mxu0 0
      %792 = vmatprep.mubr.bf16.mxu0 0
      %793 = vmatmul.mubr.bf16.gmra.mrb[0].mxu0 %v748
      %v794 = vpop.f32.mrb[0].mxu0
      %v795 = vadd.f32 %v704, %v794
      %v796 = vpop.f32.mrb[0].mxu0
      %v797 = vadd.f32 %v704, %v796
      %v798 = vpop.f32.mrb[0].mxu0
      %v799 = vpop.f32.mrb[0].mxu0
      %800 = vdwg.mxu0
      %801 = vmatprep.subr.bf16.mxu0 0
      %802 = vmatpush1.bf16.msra.mxu0 %v733
      %803 = vmatprep.subr.bf16.mxu0 0
      %804 = vmatpush1.bf16.msra.mxu0 %v736
      %805 = vmatprep.subr.bf16.mxu0 0
      %806 = vmatpush1.bf16.msra.mxu0 %v758
      %807 = vmatprep.subr.bf16.mxu0 0
      %808 = vmatpush1.bf16.msra.mxu0 0
      %809 = vmatprep.subr.bf16.mxu0 0
      %810 = vmatpush1.bf16.msra.mxu0 0
      %811 = vmatprep.subr.bf16.mxu0 0
      %812 = vmatpush1.bf16.msra.mxu0 0
      %813 = vmatprep.subr.bf16.mxu0 0
      %814 = vmatpush1.bf16.msra.mxu0 0
      %815 = vmatprep.subr.bf16.mxu0 0
      %816 = vmatpush1.bf16.msra.mxu0 0
      %817 = vmatprep.subr.bf16.mxu0 0
      %818 = vmatpush1.bf16.msra.mxu0 0
      %819 = vmatprep.subr.bf16.mxu0 0
      %820 = vmatpush1.bf16.msra.mxu0 0
      %821 = vmatprep.subr.bf16.mxu0 0
      %822 = vmatpush1.bf16.msra.mxu0 0
      %823 = vmatprep.subr.bf16.mxu0 0
      %824 = vmatpush1.bf16.msra.mxu0 0
      %825 = vmatprep.subr.bf16.mxu0 0
      %826 = vmatpush1.bf16.msra.mxu0 0
      %827 = vmatprep.subr.bf16.mxu0 0
      %828 = vmatpush1.bf16.msra.mxu0 0
      %829 = vmatprep.subr.bf16.mxu0 0
      %830 = vmatpush1.bf16.msra.mxu0 0
      %831 = vmatprep.subr.bf16.mxu0 0
      %832 = vmatpush1.bf16.msra.mxu0 0
      %833 = vmatprep.mubr.bf16.mxu0 0
      %834 = vmatmul.mubr.bf16.gmra.mrb[0].mxu0 %v748
      %v835 = vpop.f32.mrb[0].mxu0
      %v836 = vadd.f32 %v704, %v835
      %v837 = vpop.f32.mrb[0].mxu0
      %v838 = vpop.f32.mrb[0].mxu0
      %v839 = vpop.f32.mrb[0].mxu0
      %840 = vdwg.mxu0
      %v841 = vmin.f32 %v795, 20.0
      %v842 = vmin.f32 %v797, 20.0
      %v843 = vmin.f32 %v836, 20.0
      %v844 = vmul.f32 %v841, 1.442695
      %v845 = vpow.pop %v844
      %v846 = vmul.f32 %v842, 1.442695
      %v847 = vpow.pop %v846
      %v848 = vmul.f32 %v843, 1.442695
      %v849 = vpow.pop %v848
      %v850 = vadd.f32 %v845, 2.0
      %v851 = vadd.f32 %v847, 2.0
      %v852 = vadd.f32 %v849, 2.0
      %v853 = vmul.f32 %v845, %v850
      %v854 = vmul.f32 %v847, %v851
      %v855 = vmul.f32 %v849, %v852
      %v856 = vmul.f32 %v795, %v853
      %v857 = vmul.f32 %v797, %v854
      %v858 = vmul.f32 %v836, %v855
      %v859 = vadd.f32 %v853, 2.0
      %v860 = vadd.f32 %v854, 2.0
      %v861 = vadd.f32 %v855, 2.0
      %v862 = vrcp.pop %v859
      %v863 = vrcp.pop %v860
      %v864 = vrcp.pop %v861
      %v865 = vmul.f32 %v856, %v862
      %v866 = vmul.f32 %v857, %v863
      %v867 = vmul.f32 %v858, %v864
      %v868 = vpack.c.bf16 %v865, %v865
      %v869 = vpack.c.bf16 %v866, %v866
      %v870 = vpack.c.bf16 %v867, %v867
      %v874 = vunpack.c.l.b16 %v868
      %v875 = vunpack.c.l.b16 %v869
      %v876 = vunpack.c.l.b16 %v870
      %v877 = vpack.c.b16 %v875, %v874
      %v878 = vpack.c.b16 %v876, %v876
      %881 = vst [vmem:[%s300] sm:$0xff] %v877
      %882 = vst [vmem:[%s300 + $0x8] sm:$0xf] %v878
      %s883 = smul.u32 3, %s20
      %p884 = scmp.lt.s32.totalorder %s19, 1
      %s885 = scalar_select %p884, %s19, 1
      %p886 = scmp.lt.s32.totalorder %s883, 2
      %s887 = scalar_select %p886, %s883, 2
      %s888 = smul.addr %s885, 3
      %s889 = sadd.s32 %s887, %s888
      %s890 = smul.addr %s889, 4
      %s891 = scalar_lea.vmem %s4, %s890
      // Predicated region
      $region37: #{cba_forward.1} parent=35 // pred_check
        %p892 = pneg %p149
      $region38: #{cba_forward.1} parent=35 // pred_check_branch
        %894 = sbr.rel (%p892) target = $region40
      $region39: #{cba_forward.1} parent=35 // pred_region
        %s895 = smul.u32 3, %s20
      $region40: #{cba_forward.1} parent=35 // pred_fallthru
        _
    $region36: #{cba_forward.1} parent=5 // pred_fallthru
      _
    %p896 = scmp.le.s32.totalorder 2, %s10
    // Predicated region
    $region41: #{cba_forward.1} parent=5 // pred_check
      %p897 = pneg %p896
    $region42: #{cba_forward.1} parent=5 // pred_check_branch
      %899 = sbr.rel (%p897) target = $region44
    $region43: #{cba_forward.1} parent=5 // pred_region
      %s900 = ssub.s32 %s10, 2
      // Predicated region
      $region45: #{cba_forward.1} parent=43 // pred_check
        %p901 = pneg %p155
      $region46: #{cba_forward.1} parent=43 // pred_check_branch
        %903 = sbr.rel (%p901) target = $region48
      $region47: #{cba_forward.1} parent=43 // pred_region
        %s904 = smul.u32 3, %s22
        %p905 = scmp.lt.s32.totalorder %s21, 1
        %s906 = scalar_select %p905, %s21, 1
        %p907 = scmp.lt.s32.totalorder %s904, 2
        %s908 = scalar_select %p907, %s904, 2
        %s909 = smul.addr %s906, 3
        %s910 = sadd.s32 %s908, %s909
        %s911 = smul.addr %s910, 4
        %s912 = scalar_lea.vmem %s4, %s911
      $region48: #{cba_forward.1} parent=43 // pred_fallthru
        _
    $region44: #{cba_forward.1} parent=5 // pred_fallthru
      _
  $region6: #{cba_forward.1} parent=0 // loop_footer
    %s14 = sadd.s32 1, %s10
  $region7: #{cba_forward.1} parent=0 // loop_footer_branch
    %9 = sbr.rel target = $region3
  $region8: #{cba_forward.1} parent=0 // loop_exit
    _

</llo_original>
